<compile_context>
chip_gen: v7x
topology: tpu7x:2x2x1
jax: 0.10.0
libtpu: 0.0.40
codegen_flags: <defaults>
</compile_context>

<pallas_src>
import numpy as np

import jax
import jax.numpy as jnp
from jax import lax
from jax.experimental import pallas as pl
from jax.experimental.pallas import tpu as pltpu


# ----------------------------------------------------------------------------- helpers


def _round_up(x: int, m: int) -> int:
    return pl.cdiv(x, m) * m


def _num_tensorcores() -> int:
    """Best-effort TensorCores-per-chip (2 on v7x/megacore, 1 on v5e/v6e); falls back to 1."""
    try:
        info = pltpu.get_tpu_info()
        for attr in ("num_cores", "core_count", "num_tensorcores",
                     "tensorcore_count", "num_cores_per_chip"):
            v = getattr(info, attr, None)
            if isinstance(v, int) and v > 0:
                return v
    except Exception:
        pass
    try:
        v = getattr(jax.devices()[0], "num_cores", None)
        if isinstance(v, int) and v > 0:
            return v
    except Exception:
        pass
    return 1


def _choose_candidate_tiling(n: int, max_tile_n: int):
    """Pick (tile_n, padded_n): big lane-dense tiles; >= num_cores grid steps if multi-core."""
    n128 = _round_up(max(n, 1), 128)
    tile_n = min(_round_up(max_tile_n, 128), n128)
    ncores = _num_tensorcores()
    if ncores > 1:
        # Give each TensorCore at least one tile (v7x). On 1-core chips the grid is a
        # serial loop, so we do NOT shrink the tile there.
        per_core = _round_up(pl.cdiv(n128, ncores), 128)
        tile_n = min(tile_n, per_core)
    tile_n = max(tile_n, 128)
    n_pad = _round_up(n128, tile_n)
    return tile_n, n_pad


# ----------------------------------------------------------------------------- kernels


def _query_projection_kernel(q_ref, w1_ref, b1_ref, w2_ref, b2_ref, a_ref):
    # a = relu(q @ W1 + b1) @ W2 + b2      (dropout is an inference no-op)
    h = jnp.dot(q_ref[...], w1_ref[...], preferred_element_type=jnp.float32) + b1_ref[...]
    h = jnp.maximum(h, 0.0)
    a_ref[...] = (jnp.dot(h, w2_ref[...], preferred_element_type=jnp.float32)
                  + b2_ref[...]).astype(a_ref.dtype)


def _similarity_kernel(a_ref, candt_ref, out_ref):
    # logits tile = a @ cand_t[:, j*TN:(j+1)*TN]
    # Candidate count lives on the lane axis -> lane-dense, unmasked stores.
    a = a_ref[...].astype(candt_ref.dtype)     # bf16 x bf16 MXU path when candidates are bf16
    out_ref[...] = jnp.dot(a, candt_ref[...],
                           preferred_element_type=jnp.float32).astype(out_ref.dtype)


# ----------------------------------------------------------------------------- wrappers


def prepare_candidates(candidates, *, dtype=None, max_tile_n: int = 8192):
    """Cast/transpose/pad the candidate set once: [N, D] -> feature-major [D, Np].

    Amortize this across queries (the candidate set is typically static), so the kernel's
    streamed bytes are the only per-call candidate HBM traffic.  Pass dtype=jnp.bfloat16
    to halve the streamed bytes.  Returns (cand_t, N, tile_n).
    """
    n, _ = candidates.shape
    if dtype is not None:
        candidates = candidates.astype(dtype)
    tile_n, n_pad = _choose_candidate_tiling(n, max_tile_n)
    cand_t = jnp.pad(candidates.T, ((0, 0), (0, n_pad - n)))
    return cand_t, n, tile_n


def _project_query(q2, w1, b1, w2, b2):
    """[B, D] query batch -> [Bp, D] projected embeddings (Bp = sublane-padded B)."""
    b, d = q2.shape
    h = w1.shape[1]
    bp = _round_up(b, 8)
    f32 = jnp.float32
    q_pad = jnp.pad(q2.astype(f32), ((0, bp - b), (0, 0)))
    return pl.pallas_call(
        _query_projection_kernel,
        out_shape=jax.ShapeDtypeStruct((bp, d), f32),
    )(q_pad,
      w1.astype(f32), b1.reshape(1, h).astype(f32),
      w2.astype(f32), b2.reshape(1, d).astype(f32))


def answer_classifier_prepared(q, w1, b1, w2, b2, cand_t, n, tile_n, *,
                               out_dtype=jnp.float32):
    """q: [D] or [B, D]; cand_t: [D, Np] from prepare_candidates -> logits [N] or [B, N]."""
    single = q.ndim == 1
    q2 = q.reshape(1, -1) if single else q
    b = q2.shape[0]

    a = _project_query(q2, w1, b1, w2, b2)              # [Bp, D] f32
    bp, d = a.shape
    d_c, n_pad = cand_t.shape
    assert d_c == d, "candidate feature dim mismatch"
    assert n_pad % tile_n == 0, "prepared candidates must be padded to a tile multiple"
    grid_steps = n_pad // tile_n

    cand_spec = pl.BlockSpec((d, tile_n), lambda j: (0, j))
    if grid_steps >= 3:
        try:  # deeper buffering on the candidate stream (per-step compute is tiny)
            cand_spec = pl.BlockSpec((d, tile_n), lambda j: (0, j),
                                     pipeline_mode=pl.Buffered(3))
        except Exception:
            pass  # older jax without pipeline_mode: fall back to default double-buffering

    cost = pl.CostEstimate(
        flops=2 * bp * d * n_pad,
        transcendentals=0,
        bytes_accessed=(a.size * a.dtype.itemsize
                        + cand_t.size * cand_t.dtype.itemsize
                        + bp * n_pad * np.dtype(out_dtype).itemsize),
    )

    out = pl.pallas_call(
        _similarity_kernel,
        out_shape=jax.ShapeDtypeStruct((bp, n_pad), out_dtype),
        grid=(grid_steps,),
        in_specs=[
            pl.BlockSpec((bp, d), lambda j: (0, 0)),    # projected queries (resident)
            cand_spec,                                   # candidate tile (streamed)
        ],
        out_specs=pl.BlockSpec((bp, tile_n), lambda j: (0, j)),
        compiler_params=pltpu.CompilerParams(dimension_semantics=("parallel",)),
        cost_estimate=cost,
    )(a, cand_t)

    out = out[:b, :n]                                   # drop padded rows/columns
    return out.reshape(n) if single else out


def answer_classifier(q, w1, b1, w2, b2, candidates, *, cand_dtype=None,
                      max_tile_n: int = 8192, out_dtype=jnp.float32):
    """One-shot convenience wrapper (prefer prepare_candidates + *_prepared for reuse)."""
    cand_t, n, tile_n = prepare_candidates(candidates, dtype=cand_dtype,
                                           max_tile_n=max_tile_n)
    return answer_classifier_prepared(q, w1, b1, w2, b2, cand_t, n, tile_n,
                                      out_dtype=out_dtype)


# ----------------------------------------------------------------------------- reference


def _reference(q, w1, b1, w2, b2, candidates):
    hp = lax.Precision.HIGHEST
    h = jnp.maximum(jnp.dot(q, w1, precision=hp) + b1, 0.0)
    a = jnp.dot(h, w2, precision=hp) + b2
    return jnp.dot(a, candidates.T, precision=hp)


if __name__ == "__main__":
    # Small shapes consistent with the module: graph_representation_dim D = 32,
    # hidden_dim_mlp H = 64, N = 200 candidates (exercises lane padding), B = 4 queries.
    D, H, N, B = 32, 64, 200, 4

    key = jax.random.PRNGKey(0)
    k_q, k_qb, k_w1, k_b1, k_w2, k_b2, k_c = jax.random.split(key, 7)

    q_single = jax.random.normal(k_q, (D,), dtype=jnp.float32)
    q_batch = jax.random.normal(k_qb, (B, D), dtype=jnp.float32)
    w1 = jax.random.normal(k_w1, (D, H), dtype=jnp.float32) * 0.1
    b1 = jax.random.normal(k_b1, (H,), dtype=jnp.float32) * 0.1
    w2 = jax.random.normal(k_w2, (H, D), dtype=jnp.float32) * 0.1
    b2 = jax.random.normal(k_b2, (D,), dtype=jnp.float32) * 0.1
    candidates = jax.random.normal(k_c, (N, D), dtype=jnp.float32)

    ref_s = _reference(q_single, w1, b1, w2, b2, candidates)
    ref_b = _reference(q_batch, w1, b1, w2, b2, candidates)

    # 1) Single-query path (exactly the PyTorch forward): [D] -> [N], f32 candidates.
    logits_s = answer_classifier(q_single, w1, b1, w2, b2, candidates)
    jax.block_until_ready(logits_s)
    assert logits_s.shape == (N,)
    assert jnp.allclose(logits_s, ref_s, rtol=2e-2, atol=2e-2), "single-query mismatch"

    # 2) Batched queries with a pre-prepared (amortized) candidate layout.
    cand_t, n_real, tn = prepare_candidates(candidates)
    logits_b = answer_classifier_prepared(q_batch, w1, b1, w2, b2, cand_t, n_real, tn)
    jax.block_until_ready(logits_b)
    assert logits_b.shape == (B, N)
    assert jnp.allclose(logits_b, ref_b, rtol=2e-2, atol=2e-2), "batched mismatch"

    # 3) bf16 candidate streaming (halves streamed HBM bytes); looser tolerance.
    cand16, n16, tn16 = prepare_candidates(candidates, dtype=jnp.bfloat16)
    logits_16 = answer_classifier_prepared(q_batch, w1, b1, w2, b2, cand16, n16, tn16)
    jax.block_until_ready(logits_16)
    assert logits_16.shape == (B, N)
    assert jnp.allclose(logits_16, ref_b, rtol=6e-2, atol=6e-2), "bf16 candidate mismatch"

    print("KERNEL_OK")
</pallas_src>

<mosaic_0001>
module attributes {stable_mosaic.version = 11 : i64} {
  func.func @_query_projection_kernel(%arg0: memref<8x32xf32, #tpu.memory_space<vmem>>, %arg1: memref<32x64xf32, #tpu.memory_space<vmem>>, %arg2: memref<1x64xf32, #tpu.memory_space<vmem>>, %arg3: memref<64x32xf32, #tpu.memory_space<vmem>>, %arg4: memref<1x32xf32, #tpu.memory_space<vmem>>, %arg5: memref<8x32xf32, #tpu.memory_space<vmem>>) attributes {dimension_semantics = [], scalar_prefetch = 0 : i64, scratch_operands = 0 : i64, tpu.core_type = #tpu.core_type<tc>} {
    %c0 = arith.constant 0 : index
    %c0_0 = arith.constant 0 : index
    %0 = vector.load %arg0[%c0, %c0_0] : memref<8x32xf32, #tpu.memory_space<vmem>>, vector<8x32xf32>
    %c0_1 = arith.constant 0 : index
    %c0_2 = arith.constant 0 : index
    %1 = vector.load %arg1[%c0_1, %c0_2] : memref<32x64xf32, #tpu.memory_space<vmem>>, vector<32x64xf32>
    %cst = arith.constant dense<0.000000e+00> : vector<8x64xf32>
    %2 = tpu.matmul %0, %1, %cst {dimension_numbers = #tpu.dot_dimension_numbers<[1], [0], [0], [1], [0, 0, 1, 1], [], []>} : vector<8x32xf32>, vector<32x64xf32>, vector<8x64xf32> -> vector<8x64xf32>
    %c0_3 = arith.constant 0 : index
    %c0_4 = arith.constant 0 : index
    %3 = vector.load %arg2[%c0_3, %c0_4] : memref<1x64xf32, #tpu.memory_space<vmem>>, vector<1x64xf32>
    %4 = vector.broadcast %3 : vector<1x64xf32> to vector<8x64xf32>
    %5 = arith.addf %2, %4 : vector<8x64xf32>
    %cst_5 = arith.constant 0.000000e+00 : f32
    %6 = vector.broadcast %cst_5 : f32 to vector<8x64xf32>
    %7 = arith.maximumf %5, %6 : vector<8x64xf32>
    %c0_6 = arith.constant 0 : index
    %c0_7 = arith.constant 0 : index
    %8 = vector.load %arg3[%c0_6, %c0_7] : memref<64x32xf32, #tpu.memory_space<vmem>>, vector<64x32xf32>
    %cst_8 = arith.constant dense<0.000000e+00> : vector<8x32xf32>
    %9 = tpu.matmul %7, %8, %cst_8 {dimension_numbers = #tpu.dot_dimension_numbers<[1], [0], [0], [1], [0, 0, 1, 1], [], []>} : vector<8x64xf32>, vector<64x32xf32>, vector<8x32xf32> -> vector<8x32xf32>
    %c0_9 = arith.constant 0 : index
    %c0_10 = arith.constant 0 : index
    %10 = vector.load %arg4[%c0_9, %c0_10] : memref<1x32xf32, #tpu.memory_space<vmem>>, vector<1x32xf32>
    %11 = vector.broadcast %10 : vector<1x32xf32> to vector<8x32xf32>
    %12 = arith.addf %9, %11 : vector<8x32xf32>
    %c0_11 = arith.constant 0 : index
    %c0_12 = arith.constant 0 : index
    %13 = vector.load %arg5[%c0_11, %c0_12] : memref<8x32xf32, #tpu.memory_space<vmem>>, vector<8x32xf32>
    tpu.vector_store %arg5[%c0_11, %c0_12], %12 {strides = array<i32>} : memref<8x32xf32, #tpu.memory_space<vmem>>, vector<8x32xf32>,
    return
  }
}

</mosaic_0001>

<llo_original>
// kernel: tpu_custom_call.1
$region0: #{tpu_custom_call.1}
  #allocation0 [shape = 'u32[]', space=smem, size = 0x4, offset = 0x4, fixed_abs, tag = 'smem constant byte address 0x4 - core index']
  #allocation1 [shape = 'u32[144,128]{1,0:T(1,128)}', space=vmem, size = 0x12000, scoped, tag = 'internal scratch']
  %s0 = inlined_call_operand.vmem [shape: f32[8,32], index: 0, kind: input, shape index: {}]
  %s1 = inlined_call_operand.vmem [shape: f32[32,64], index: 1, kind: input, shape index: {}]
  %s2 = inlined_call_operand.vmem [shape: f32[1,64], index: 2, kind: input, shape index: {}]
  %s3 = inlined_call_operand.vmem [shape: f32[64,32], index: 3, kind: input, shape index: {}]
  %s4 = inlined_call_operand.vmem [shape: f32[1,32], index: 4, kind: input, shape index: {}]
  %s5 = inlined_call_operand.hbm [shape: f32[8,32], index: 5, kind: output, shape index: {}]
  %s6 = sld [smem:[#allocation0]]
  $region30: #{tpu_custom_call.1} parent=0
    _
  %s8 = ssub.s32 1, %s6
  %s9 = scalar_select 0, %s8, %s6
  $region1: #{tpu_custom_call.1} parent=0
    #allocation2 [shape = 'u8[4096]{0}', space=vmem, size = 0x1000, scoped, tag = 'output window, operand 0, single buffered']
    #allocation3 [shape = 's32[1]{0}', space=sflag, size = 0x4, scoped, tag = 'scoped memory for tpu_custom_call.1']
    %10 = vsyncpa [#allocation3], 0
    // Predicated region
    $region2: #{tpu_custom_call.1} parent=1 // pred_check
      _
    $region3: #{tpu_custom_call.1} parent=1 // pred_check_branch
      %12 = sbr.rel (0) target = $region5
    $region4: #{tpu_custom_call.1} parent=1 // pred_region
      _
    $region5: #{tpu_custom_call.1} parent=1 // pred_fallthru
      _
    // Predicated region
    $region6: #{tpu_custom_call.1} parent=1 // pred_check
      _
    $region7: #{tpu_custom_call.1} parent=1 // pred_check_branch
      %14 = sbr.rel (0) target = $region9
    $region8: #{tpu_custom_call.1} parent=1 // pred_region
      _
    $region9: #{tpu_custom_call.1} parent=1 // pred_fallthru
      _
    // Predicated region
    $region10: #{tpu_custom_call.1} parent=1 // pred_check
      _
    $region11: #{tpu_custom_call.1} parent=1 // pred_check_branch
      %16 = sbr.rel (0) target = $region13
    $region12: #{tpu_custom_call.1} parent=1 // pred_region
      _
    $region13: #{tpu_custom_call.1} parent=1 // pred_fallthru
      _
    // Predicated region
    $region14: #{tpu_custom_call.1} parent=1 // pred_check
      _
    $region15: #{tpu_custom_call.1} parent=1 // pred_check_branch
      %18 = sbr.rel (0) target = $region17
    $region16: #{tpu_custom_call.1} parent=1 // pred_region
      _
    $region17: #{tpu_custom_call.1} parent=1 // pred_fallthru
      _
    // Predicated region
    $region18: #{tpu_custom_call.1} parent=1 // pred_check
      _
    $region19: #{tpu_custom_call.1} parent=1 // pred_check_branch
      %20 = sbr.rel (0) target = $region21
    $region20: #{tpu_custom_call.1} parent=1 // pred_region
      _
    $region21: #{tpu_custom_call.1} parent=1 // pred_fallthru
      _
    %v21 = vld [vmem:[%s0] sm:$0xff]
    %v22 = vld [vmem:[%s1] sm:$0xff]
    %v23 = vld [vmem:[%s1 + $0x8] sm:$0xff]
    %v24 = vld [vmem:[%s1 + $0x10] sm:$0xff]
    %v25 = vld [vmem:[%s1 + $0x18] sm:$0xff]
    %v26 = vld [vmem:[%s2] sm:$0x1]
    %v28 = vlaneseq
    %v29 = vshrl.u32 %v28, 7
    %v30 = vsub.s32 0, %v29
    %v31 = vrot.slane %v26, %v30
    %vm33 = vcmask 261120
    %v35 = vsel %vm33, %v21, 0
    %37 = vmatprep.subr.mxu0 0.0
    %38 = vmatpush1.msra.mxu0 %v22
    %39 = vmatprep.subr.mxu0 0.0
    %40 = vmatpush1.msra.mxu0 %v23
    %41 = vmatprep.subr.mxu0 0.0
    %42 = vmatpush1.msra.mxu0 %v24
    %43 = vmatprep.subr.mxu0 0.0
    %44 = vmatpush1.msra.mxu0 %v25
    %45 = vmatprep.subr.mxu0 0.0
    %46 = vmatpush1.msra.mxu0 0.0
    %47 = vmatprep.subr.mxu0 0.0
    %48 = vmatpush1.msra.mxu0 0.0
    %49 = vmatprep.subr.mxu0 0.0
    %50 = vmatpush1.msra.mxu0 0.0
    %51 = vmatprep.subr.mxu0 0.0
    %52 = vmatpush1.msra.mxu0 0.0
    %53 = vmatprep.subr.mxu0 0.0
    %54 = vmatpush1.msra.mxu0 0.0
    %55 = vmatprep.subr.mxu0 0.0
    %56 = vmatpush1.msra.mxu0 0.0
    %57 = vmatprep.subr.mxu0 0.0
    %58 = vmatpush1.msra.mxu0 0.0
    %59 = vmatprep.subr.mxu0 0.0
    %60 = vmatpush1.msra.mxu0 0.0
    %61 = vmatprep.subr.mxu0 0.0
    %62 = vmatpush1.msra.mxu0 0.0
    %63 = vmatprep.subr.mxu0 0.0
    %64 = vmatpush1.msra.mxu0 0.0
    %65 = vmatprep.subr.mxu0 0.0
    %66 = vmatpush1.msra.mxu0 0.0
    %67 = vmatprep.subr.mxu0 0.0
    %68 = vmatpush1.msra.mxu0 0.0
    %69 = vmatprep.subr.mxu0 0.0
    %70 = vmatpush1.msra.mxu0 0.0
    %71 = vmatprep.subr.mxu0 0.0
    %72 = vmatpush1.msra.mxu0 0.0
    %73 = vmatprep.subr.mxu0 0.0
    %74 = vmatpush1.msra.mxu0 0.0
    %75 = vmatprep.subr.mxu0 0.0
    %76 = vmatpush1.msra.mxu0 0.0
    %77 = vmatprep.subr.mxu0 0.0
    %78 = vmatpush1.msra.mxu0 0.0
    %79 = vmatprep.subr.mxu0 0.0
    %80 = vmatpush1.msra.mxu0 0.0
    %81 = vmatprep.subr.mxu0 0.0
    %82 = vmatpush1.msra.mxu0 0.0
    %83 = vmatprep.subr.mxu0 0.0
    %84 = vmatpush1.msra.mxu0 0.0
    %85 = vmatprep.subr.mxu0 0.0
    %86 = vmatpush1.msra.mxu0 0.0
    %87 = vmatprep.subr.mxu0 0.0
    %88 = vmatpush1.msra.mxu0 0.0
    %89 = vmatprep.subr.mxu0 0.0
    %90 = vmatpush1.msra.mxu0 0.0
    %91 = vmatprep.subr.mxu0 0.0
    %92 = vmatpush1.msra.mxu0 0.0
    %93 = vmatprep.subr.mxu0 0.0
    %94 = vmatpush1.msra.mxu0 0.0
    %95 = vmatprep.subr.mxu0 0.0
    %96 = vmatpush1.msra.mxu0 0.0
    %97 = vmatprep.subr.mxu0 0.0
    %98 = vmatpush1.msra.mxu0 0.0
    %99 = vmatprep.subr.mxu0 0.0
    %100 = vmatpush1.msra.mxu0 0.0
    %101 = vmatprep.mubr.f32.mxu0 0.0
    %102 = vmatmul.mubr.f32.gmra.mrb[0].mxu0 %v35
    %v103 = vpop.f32.mrb[0].mxu0
    %v104 = vadd.f32 %v31, %v103
    %v105 = vpop.f32.mrb[0].mxu0
    %106 = vdwg.mxu0
    %v107 = vmax.f32 %v104, 0.0
    %v108 = vld [vmem:[%s3] sm:$0xff]
    %v109 = vld [vmem:[%s3 + $0x8] sm:$0xff]
    %v110 = vld [vmem:[%s3 + $0x10] sm:$0xff]
    %v111 = vld [vmem:[%s3 + $0x18] sm:$0xff]
    %v112 = vld [vmem:[%s3 + $0x20] sm:$0xff]
    %v113 = vld [vmem:[%s3 + $0x28] sm:$0xff]
    %v114 = vld [vmem:[%s3 + $0x30] sm:$0xff]
    %v115 = vld [vmem:[%s3 + $0x38] sm:$0xff]
    %v116 = vld [vmem:[%s4] sm:$0x1]
    %v118 = vlaneseq
    %v119 = vshrl.u32 %v118, 7
    %v120 = vsub.s32 0, %v119
    %v121 = vrot.slane %v116, %v120
    %vm123 = vcmask 523264
    %v125 = vsel %vm123, %v107, 0
    %127 = vmatprep.subr.mxu0 0.0
    %128 = vmatpush1.msra.mxu0 %v108
    %129 = vmatprep.subr.mxu0 0.0
    %130 = vmatpush1.msra.mxu0 %v109
    %131 = vmatprep.subr.mxu0 0.0
    %132 = vmatpush1.msra.mxu0 %v110
    %133 = vmatprep.subr.mxu0 0.0
    %134 = vmatpush1.msra.mxu0 %v111
    %135 = vmatprep.subr.mxu0 0.0
    %136 = vmatpush1.msra.mxu0 %v112
    %137 = vmatprep.subr.mxu0 0.0
    %138 = vmatpush1.msra.mxu0 %v113
    %139 = vmatprep.subr.mxu0 0.0
    %140 = vmatpush1.msra.mxu0 %v114
    %141 = vmatprep.subr.mxu0 0.0
    %142 = vmatpush1.msra.mxu0 %v115
    %143 = vmatprep.subr.mxu0 0.0
    %144 = vmatpush1.msra.mxu0 0.0
    %145 = vmatprep.subr.mxu0 0.0
    %146 = vmatpush1.msra.mxu0 0.0
    %147 = vmatprep.subr.mxu0 0.0
    %148 = vmatpush1.msra.mxu0 0.0
    %149 = vmatprep.subr.mxu0 0.0
    %150 = vmatpush1.msra.mxu0 0.0
    %151 = vmatprep.subr.mxu0 0.0
    %152 = vmatpush1.msra.mxu0 0.0
    %153 = vmatprep.subr.mxu0 0.0
    %154 = vmatpush1.msra.mxu0 0.0
    %155 = vmatprep.subr.mxu0 0.0
    %156 = vmatpush1.msra.mxu0 0.0
    %157 = vmatprep.subr.mxu0 0.0
    %158 = vmatpush1.msra.mxu0 0.0
    %159 = vmatprep.subr.mxu0 0.0
    %160 = vmatpush1.msra.mxu0 0.0
    %161 = vmatprep.subr.mxu0 0.0
    %162 = vmatpush1.msra.mxu0 0.0
    %163 = vmatprep.subr.mxu0 0.0
    %164 = vmatpush1.msra.mxu0 0.0
    %165 = vmatprep.subr.mxu0 0.0
    %166 = vmatpush1.msra.mxu0 0.0
    %167 = vmatprep.subr.mxu0 0.0
    %168 = vmatpush1.msra.mxu0 0.0
    %169 = vmatprep.subr.mxu0 0.0
    %170 = vmatpush1.msra.mxu0 0.0
    %171 = vmatprep.subr.mxu0 0.0
    %172 = vmatpush1.msra.mxu0 0.0
    %173 = vmatprep.subr.mxu0 0.0
    %174 = vmatpush1.msra.mxu0 0.0
    %175 = vmatprep.subr.mxu0 0.0
    %176 = vmatpush1.msra.mxu0 0.0
    %177 = vmatprep.subr.mxu0 0.0
    %178 = vmatpush1.msra.mxu0 0.0
    %179 = vmatprep.subr.mxu0 0.0
    %180 = vmatpush1.msra.mxu0 0.0
    %181 = vmatprep.subr.mxu0 0.0
    %182 = vmatpush1.msra.mxu0 0.0
    %183 = vmatprep.subr.mxu0 0.0
    %184 = vmatpush1.msra.mxu0 0.0
    %185 = vmatprep.subr.mxu0 0.0
    %186 = vmatpush1.msra.mxu0 0.0
    %187 = vmatprep.subr.mxu0 0.0
    %188 = vmatpush1.msra.mxu0 0.0
    %189 = vmatprep.subr.mxu0 0.0
    %190 = vmatpush1.msra.mxu0 0.0
    %191 = vmatprep.mubr.f32.mxu0 0.0
    %192 = vmatmul.mubr.f32.gmra.mrb[0].mxu0 %v125
    %v193 = vpop.f32.mrb[0].mxu0
    %v194 = vadd.f32 %v121, %v193
    %v195 = vpop.f32.mrb[0].mxu0
    %196 = vdwg.mxu0
    %197 = vst.msk [vmem:[#allocation2] sm:$0xff] %vm33, %v194
    // Predicated region
    $region22: #{tpu_custom_call.1} parent=1 // pred_check
      _
    $region23: #{tpu_custom_call.1} parent=1 // pred_check_branch
      %199 = sbr.rel (0) target = $region25
    $region24: #{tpu_custom_call.1} parent=1 // pred_region
      %s201 = ssub.s32 128, 128
      %202 = vsyncadd [#allocation3], %s201
      %s204 = sshll.u32 [#allocation2], 4
      %s205 = int_to_ptr.vmem [resolvable:$true] %s204
      %207 = dma.vmem_to_hbm [thread:$0]  %s205, 128, %s5, [#allocation3]
    $region25: #{tpu_custom_call.1} parent=1 // pred_fallthru
      _
    // Predicated region
    $region26: #{tpu_custom_call.1} parent=1 // pred_check
      _
    $region27: #{tpu_custom_call.1} parent=1 // pred_check_branch
      %209 = sbr.rel (0) target = $region29
    $region28: #{tpu_custom_call.1} parent=1 // pred_region
      %210 = dma.done [#allocation3], 128
    $region29: #{tpu_custom_call.1} parent=1 // pred_fallthru
      _
    %211 = vsyncpa [#allocation3], 1

</llo_original>
